<compile_context>
chip_gen: v5e
topology: v5e:2x2
jax: 0.10.0
libtpu: 0.0.40
codegen_flags: <defaults>
</compile_context>

<pallas_src>
import jax
import jax.numpy as jnp
from jax.experimental import pallas as pl
from jax.experimental.pallas import tpu as pltpu

HIDDEN_DIM = 8


# ---------------------------------------------------------------------------
# Semantic-type machinery (pure Python, mirrors the torch module)
# ---------------------------------------------------------------------------
def get_semantic_type_dims(semantic_type):
    s = str(semantic_type)
    d = {
        "e": (-1, 1, HIDDEN_DIM),
        "t": (-1, 1),
        "<e,t>": (-1, HIDDEN_DIM, 1),
        "<<e,t>,e>": (-1, HIDDEN_DIM, HIDDEN_DIM),
        "<e,<e,t>>": (-1, HIDDEN_DIM, HIDDEN_DIM),
        "<<e,t>,<e,t>>": (-1, HIDDEN_DIM, HIDDEN_DIM),
    }
    return d[s]


class SemanticTypePrimitive:
    e = "e"
    t = "t"


class SemanticType:
    """Functional semantic type <lhs, rhs>; calling it performs application."""

    def __init__(self, lhs, rhs):
        self.lhs = lhs
        self.rhs = rhs

    def __call__(self, argument_type):
        return self.rhs

    def __str__(self):
        return f"<{self.lhs},{self.rhs}>"


# ---------------------------------------------------------------------------
# Pallas kernel: batched (arg @ fn) + tanh, batch on lanes, H-major accumulate
# ---------------------------------------------------------------------------
def _semantic_apply_kernel(arg_ref, fn_ref, out_ref):
    # arg_ref: (H, TB)   fn_ref: (H, N, TB)   out_ref: (N, TB)
    # out[n, b] = tanh( sum_h arg[h, b] * fn[h, n, b] )
    a = arg_ref[...].astype(jnp.float32)                     # (H, TB), f32 in VMEM
    h_dim = a.shape[0]                                       # static (HIDDEN_DIM)
    acc = a[0:1, :] * fn_ref[0].astype(jnp.float32)          # (1,TB)*(N,TB) -> (N,TB)
    for h in range(1, h_dim):                                # static unroll, H = 8
        acc = acc + a[h:h + 1, :] * fn_ref[h].astype(jnp.float32)   # dense VPU FMAs
    out_ref[...] = jnp.tanh(acc).astype(out_ref.dtype)       # ONE tanh, ONE dense store


def _round_up(x, m):
    return ((x + m - 1) // m) * m


def _pick_tile(batch, block_b):
    """Lane-tile size for the batch axis.

    Guarantees >= 2 grid steps when batch is large enough (so v7x's two
    TensorCores both get work), keeps the tile a multiple of 128, and caps it
    at block_b so the double-buffered working set stays well under the scoped
    VMEM limit on every generation (v5e/v6e/v7x)."""
    assert block_b % 128 == 0
    if batch <= 256:
        return batch          # single block == full array dims (valid BlockSpec)
    return min(block_b, _round_up(pl.cdiv(batch, 2), 128))


def semantic_apply_lane_major(arg_lm, fn_lm, block_b=32768):
    """Lane-major semantic application.

    arg_lm: (H, B)      (any float dtype; bf16 recommended)
    fn_lm:  (H, N, B)   (any float dtype; bf16 recommended)
    returns (N, B) float32, out[n, b] = tanh(sum_h arg[h, b] * fn[h, n, b]).

    Equivalent to tanh(matmul(argument_(B,1,H), function_(B,H,N))) transposed
    to batch-on-lanes.  block_b=32768 is safe everywhere; v5e/v6e (128 MiB
    VMEM) can pass block_b=65536 to amortize per-grid-step overhead further.
    """
    H, B = arg_lm.shape
    Hf, N, Bf = fn_lm.shape
    assert H == HIDDEN_DIM and Hf == H and Bf == B

    tb = _pick_tile(B, block_b)
    grid = (pl.cdiv(B, tb),)                  # ragged tail -> Pallas boundary block

    return pl.pallas_call(
        _semantic_apply_kernel,
        out_shape=jax.ShapeDtypeStruct((N, B), jnp.float32),
        grid_spec=pltpu.PrefetchScalarGridSpec(
            num_scalar_prefetch=0,
            grid=grid,
            in_specs=[
                pl.BlockSpec((H, tb), lambda i: (0, i)),
                pl.BlockSpec((H, N, tb), lambda i: (0, 0, i)),
            ],
            out_specs=pl.BlockSpec((N, tb), lambda i: (0, i)),
        ),
        compiler_params=pltpu.CompilerParams(
            dimension_semantics=("parallel",),       # batch grid split across TCs (v7x)
            vmem_limit_bytes=32 * 1024 * 1024,
        ),
    )(arg_lm, fn_lm)


# ---------------------------------------------------------------------------
# JAX mirrors of the nn.Module classes
# ---------------------------------------------------------------------------
class SemanticEntry:
    def __init__(self, name, semantic_type):
        self.name = name
        self.semantic_type = semantic_type

    def forward(self, state):
        # Base class performs no compute (returns None in the reference).
        return None

    def compose(self, argument):
        return SemanticIntensionApplication(function_module=self, argument_module=argument)

    def __str__(self):
        return f"Intension[{self.name}]"


class LeafSemanticEntry(SemanticEntry):
    """Synthetic leaf: deterministic linear map of `state`, born batch-on-lanes.
    (The reference base class returns None; leaves here just supply tensors.)"""

    def __init__(self, name, semantic_type, key, dtype=jnp.bfloat16):
        super().__init__(name, semantic_type)
        dims = get_semantic_type_dims(semantic_type)
        out_elems = 1
        for d in dims[1:]:
            out_elems *= d
        self._dims = dims
        self._out_elems = out_elems
        self.dtype = dtype          # bf16: halves HBM bytes of the streamed intension
        self.W = jax.random.normal(key, (HIDDEN_DIM, out_elems), dtype=jnp.float32) * 0.5

    def forward_lane_major(self, state):
        # Born lane-major (F, B) = tanh(W.T @ state.T): no transpose of the big
        # tensor is ever needed downstream.
        y = jnp.tanh(jnp.matmul(self.W.T, state.T))          # (F, B) f32
        return y.astype(self.dtype)

    def forward(self, state):
        # Standard (torch-layout) view, only used at a tree root / by the reference.
        y = self.forward_lane_major(state)                   # (F, B)
        return jnp.transpose(y, (1, 0)).reshape(self._dims)


class SemanticIntensionApplication(SemanticEntry):
    def __init__(self, function_module, argument_module):
        super().__init__(
            name=f"{function_module.name}({argument_module.name})",
            semantic_type=function_module.semantic_type(argument_module.semantic_type),
        )
        self.function_module = function_module
        self.argument_module = argument_module
        # TODO(synk): torch also registers children via add_module; pure bookkeeping, no JAX analogue.

    def forward_lane_major(self, state):
        # Children stay batch-on-lanes across the whole composition tree; no
        # per-node transposes (transpose once at the root in .forward()).
        fn_lm = self.function_module.forward_lane_major(state)    # (H*N, B)
        arg_lm = self.argument_module.forward_lane_major(state)   # (H, B)
        # Faithful to torch: only re-view the argument when lhs == '<e,t>'
        # (a flatten to 'e' dims); lane-major this is an identity reshape.
        if str(self.function_module.semantic_type.lhs) == "<e,t>":
            arg_lm = arg_lm.reshape(HIDDEN_DIM, arg_lm.shape[-1])
        fn_dims = get_semantic_type_dims(self.function_module.semantic_type)
        h, n = fn_dims[1], fn_dims[2]
        fn_lm = fn_lm.reshape(h, n, fn_lm.shape[-1])               # free major-dim split
        return semantic_apply_lane_major(arg_lm, fn_lm)            # (N, B) f32

    def forward(self, state):
        # Torch-faithful output layout: single transpose at the root, then view
        # to the result-type dims.
        out_lm = self.forward_lane_major(state)                    # (N, B)
        rhs_dims = get_semantic_type_dims(self.function_module.semantic_type.rhs)
        return jnp.transpose(out_lm, (1, 0)).reshape(rhs_dims)


# ---------------------------------------------------------------------------
# Pure-JAX reference of the torch forward (exact f32 contraction)
# ---------------------------------------------------------------------------
def _reference_apply(argument, function, rhs_type):
    # argument: (B, 1, H), function: (B, H, N)
    a = argument.astype(jnp.float32)
    f = function.astype(jnp.float32)
    ext = jnp.einsum("bih,bhn->bin", a, f, precision=jax.lax.Precision.HIGHEST)
    return jnp.tanh(ext.reshape(get_semantic_type_dims(rhs_type)))


if __name__ == "__main__":
    key = jax.random.PRNGKey(0)
    k_state, k_e, k_et, k_etet, k_g1, k_g2 = jax.random.split(key, 6)

    B = 8
    state = jax.random.normal(k_state, (B, HIDDEN_DIM), dtype=jnp.float32)

    # Leaves
    john = LeafSemanticEntry("john", SemanticTypePrimitive.e, k_e)                 # type e
    runs = LeafSemanticEntry("runs", SemanticType("e", "t"), k_et)                 # type <e,t>
    nott = LeafSemanticEntry("not", SemanticType(SemanticType("e", "t"),
                                                 SemanticType("e", "t")), k_etet)  # <<e,t>,<e,t>>

    # Application 1: runs(john) -> type t, dims (B, 1)
    app1 = runs.compose(john)
    out1 = app1.forward(state)
    jax.block_until_ready(out1)
    ref1 = _reference_apply(
        john.forward(state).reshape(get_semantic_type_dims("e")),
        runs.forward(state),
        runs.semantic_type.rhs,
    )
    assert out1.shape == (B, 1), out1.shape
    assert jnp.allclose(out1, ref1, atol=1e-4, rtol=1e-4)

    # Application 2: not(runs) -> type <e,t>, dims (B, HIDDEN_DIM, 1)
    # exercises the `if lhs == '<e,t>'` re-view branch of the reference forward
    app2 = nott.compose(runs)
    out2 = app2.forward(state)
    jax.block_until_ready(out2)
    ref2 = _reference_apply(
        runs.forward(state).reshape(get_semantic_type_dims("e")),
        nott.forward(state),
        nott.semantic_type.rhs,
    )
    assert out2.shape == (B, HIDDEN_DIM, 1), out2.shape
    assert jnp.allclose(out2, ref2, atol=1e-4, rtol=1e-4)

    # Application 3: (not(runs))(john) -> type t; an intermediate application
    # output is consumed lane-major as the parent's function tensor, with no
    # intermediate transposes.
    app3 = app2.compose(john)
    out3 = app3.forward(state)
    jax.block_until_ready(out3)
    ref3 = _reference_apply(
        john.forward(state).reshape(get_semantic_type_dims("e")),
        ref2,
        app2.semantic_type.rhs,
    )
    assert out3.shape == (B, 1), out3.shape
    assert jnp.allclose(out3, ref3, atol=1e-4, rtol=1e-4)

    # Directly exercise the multi-step grid with a ragged boundary block:
    # B=296, tile=128 -> grid=(3,), last block handled by Pallas OOB masking
    # (no jnp.pad materialization).
    Bg, Ng = 296, HIDDEN_DIM
    arg_g = jax.random.normal(k_g1, (HIDDEN_DIM, Bg), dtype=jnp.float32).astype(jnp.bfloat16)
    fn_g = jax.random.normal(k_g2, (HIDDEN_DIM, Ng, Bg), dtype=jnp.float32).astype(jnp.bfloat16)
    out_g = semantic_apply_lane_major(arg_g, fn_g, block_b=128)
    jax.block_until_ready(out_g)
    ref_g = jnp.tanh(jnp.einsum("hb,hnb->nb",
                                arg_g.astype(jnp.float32), fn_g.astype(jnp.float32),
                                precision=jax.lax.Precision.HIGHEST))
    assert out_g.shape == (Ng, Bg), out_g.shape
    assert jnp.allclose(out_g, ref_g, atol=1e-4, rtol=1e-4)

    print("KERNEL_OK")
</pallas_src>

<mosaic_0001>
module attributes {stable_mosaic.version = 11 : i64} {
  func.func @_semantic_apply_kernel(%arg0: i32, %arg1: memref<8x8xbf16, #tpu.memory_space<vmem>>, %arg2: memref<8x1x8xbf16, #tpu.memory_space<vmem>>, %arg3: memref<1x8xf32, #tpu.memory_space<vmem>>) attributes {dimension_semantics = [#tpu.dimension_semantics<parallel>], iteration_bounds = array<i64: 1>, scalar_prefetch = 0 : i64, scratch_operands = 0 : i64, tpu.core_type = #tpu.core_type<tc>, window_params = [{transform_indices = @transform_0, window_bounds = array<i64: 8, 8>}, {transform_indices = @transform_1, window_bounds = array<i64: 8, 1, 8>}, {transform_indices = @transform_2, window_bounds = array<i64: 1, 8>}]} {
    %c0 = arith.constant 0 : index
    %c0_0 = arith.constant 0 : index
    %0 = vector.load %arg1[%c0, %c0_0] : memref<8x8xbf16, #tpu.memory_space<vmem>>, vector<8x8xbf16>
    %1 = arith.extf %0 : vector<8x8xbf16> to vector<8x8xf32>
    %2 = vector.extract_strided_slice %1 {offsets = [0, 0], sizes = [1, 8], strides = [1, 1]} : vector<8x8xf32> to vector<1x8xf32>
    %c0_1 = arith.constant 0 : index
    %c0_2 = arith.constant 0 : index
    %c0_3 = arith.constant 0 : index
    %3 = vector.load %arg2[%c0_1, %c0_2, %c0_3] : memref<8x1x8xbf16, #tpu.memory_space<vmem>>, vector<1x1x8xbf16>
    %4 = vector.shape_cast %3 : vector<1x1x8xbf16> to vector<1x8xbf16>
    %5 = arith.extf %4 : vector<1x8xbf16> to vector<1x8xf32>
    %6 = arith.mulf %2, %5 : vector<1x8xf32>
    %7 = vector.extract_strided_slice %1 {offsets = [1, 0], sizes = [1, 8], strides = [1, 1]} : vector<8x8xf32> to vector<1x8xf32>
    %c1 = arith.constant 1 : index
    %c0_4 = arith.constant 0 : index
    %c0_5 = arith.constant 0 : index
    %8 = vector.load %arg2[%c1, %c0_4, %c0_5] : memref<8x1x8xbf16, #tpu.memory_space<vmem>>, vector<1x1x8xbf16>
    %9 = vector.shape_cast %8 : vector<1x1x8xbf16> to vector<1x8xbf16>
    %10 = arith.extf %9 : vector<1x8xbf16> to vector<1x8xf32>
    %11 = arith.mulf %7, %10 : vector<1x8xf32>
    %12 = arith.addf %6, %11 : vector<1x8xf32>
    %13 = vector.extract_strided_slice %1 {offsets = [2, 0], sizes = [1, 8], strides = [1, 1]} : vector<8x8xf32> to vector<1x8xf32>
    %c2 = arith.constant 2 : index
    %c0_6 = arith.constant 0 : index
    %c0_7 = arith.constant 0 : index
    %14 = vector.load %arg2[%c2, %c0_6, %c0_7] : memref<8x1x8xbf16, #tpu.memory_space<vmem>>, vector<1x1x8xbf16>
    %15 = vector.shape_cast %14 : vector<1x1x8xbf16> to vector<1x8xbf16>
    %16 = arith.extf %15 : vector<1x8xbf16> to vector<1x8xf32>
    %17 = arith.mulf %13, %16 : vector<1x8xf32>
    %18 = arith.addf %12, %17 : vector<1x8xf32>
    %19 = vector.extract_strided_slice %1 {offsets = [3, 0], sizes = [1, 8], strides = [1, 1]} : vector<8x8xf32> to vector<1x8xf32>
    %c3 = arith.constant 3 : index
    %c0_8 = arith.constant 0 : index
    %c0_9 = arith.constant 0 : index
    %20 = vector.load %arg2[%c3, %c0_8, %c0_9] : memref<8x1x8xbf16, #tpu.memory_space<vmem>>, vector<1x1x8xbf16>
    %21 = vector.shape_cast %20 : vector<1x1x8xbf16> to vector<1x8xbf16>
    %22 = arith.extf %21 : vector<1x8xbf16> to vector<1x8xf32>
    %23 = arith.mulf %19, %22 : vector<1x8xf32>
    %24 = arith.addf %18, %23 : vector<1x8xf32>
    %25 = vector.extract_strided_slice %1 {offsets = [4, 0], sizes = [1, 8], strides = [1, 1]} : vector<8x8xf32> to vector<1x8xf32>
    %c4 = arith.constant 4 : index
    %c0_10 = arith.constant 0 : index
    %c0_11 = arith.constant 0 : index
    %26 = vector.load %arg2[%c4, %c0_10, %c0_11] : memref<8x1x8xbf16, #tpu.memory_space<vmem>>, vector<1x1x8xbf16>
    %27 = vector.shape_cast %26 : vector<1x1x8xbf16> to vector<1x8xbf16>
    %28 = arith.extf %27 : vector<1x8xbf16> to vector<1x8xf32>
    %29 = arith.mulf %25, %28 : vector<1x8xf32>
    %30 = arith.addf %24, %29 : vector<1x8xf32>
    %31 = vector.extract_strided_slice %1 {offsets = [5, 0], sizes = [1, 8], strides = [1, 1]} : vector<8x8xf32> to vector<1x8xf32>
    %c5 = arith.constant 5 : index
    %c0_12 = arith.constant 0 : index
    %c0_13 = arith.constant 0 : index
    %32 = vector.load %arg2[%c5, %c0_12, %c0_13] : memref<8x1x8xbf16, #tpu.memory_space<vmem>>, vector<1x1x8xbf16>
    %33 = vector.shape_cast %32 : vector<1x1x8xbf16> to vector<1x8xbf16>
    %34 = arith.extf %33 : vector<1x8xbf16> to vector<1x8xf32>
    %35 = arith.mulf %31, %34 : vector<1x8xf32>
    %36 = arith.addf %30, %35 : vector<1x8xf32>
    %37 = vector.extract_strided_slice %1 {offsets = [6, 0], sizes = [1, 8], strides = [1, 1]} : vector<8x8xf32> to vector<1x8xf32>
    %c6 = arith.constant 6 : index
    %c0_14 = arith.constant 0 : index
    %c0_15 = arith.constant 0 : index
    %38 = vector.load %arg2[%c6, %c0_14, %c0_15] : memref<8x1x8xbf16, #tpu.memory_space<vmem>>, vector<1x1x8xbf16>
    %39 = vector.shape_cast %38 : vector<1x1x8xbf16> to vector<1x8xbf16>
    %40 = arith.extf %39 : vector<1x8xbf16> to vector<1x8xf32>
    %41 = arith.mulf %37, %40 : vector<1x8xf32>
    %42 = arith.addf %36, %41 : vector<1x8xf32>
    %43 = vector.extract_strided_slice %1 {offsets = [7, 0], sizes = [1, 8], strides = [1, 1]} : vector<8x8xf32> to vector<1x8xf32>
    %c7 = arith.constant 7 : index
    %c0_16 = arith.constant 0 : index
    %c0_17 = arith.constant 0 : index
    %44 = vector.load %arg2[%c7, %c0_16, %c0_17] : memref<8x1x8xbf16, #tpu.memory_space<vmem>>, vector<1x1x8xbf16>
    %45 = vector.shape_cast %44 : vector<1x1x8xbf16> to vector<1x8xbf16>
    %46 = arith.extf %45 : vector<1x8xbf16> to vector<1x8xf32>
    %47 = arith.mulf %43, %46 : vector<1x8xf32>
    %48 = arith.addf %42, %47 : vector<1x8xf32>
    %49 = math.tanh %48 : vector<1x8xf32>
    %c0_18 = arith.constant 0 : index
    %c0_19 = arith.constant 0 : index
    %50 = vector.load %arg3[%c0_18, %c0_19] : memref<1x8xf32, #tpu.memory_space<vmem>>, vector<1x8xf32>
    tpu.vector_store %arg3[%c0_18, %c0_19], %49 {strides = array<i32>} : memref<1x8xf32, #tpu.memory_space<vmem>>, vector<1x8xf32>,
    return
  }
  func.func @transform_0(%arg0: i32) -> (i32, i32) {
    %c0_i32 = arith.constant 0 : i32
    %c0_i32_0 = arith.constant 0 : i32
    return %c0_i32, %arg0 : i32, i32
  }
  func.func @transform_1(%arg0: i32) -> (i32, i32, i32) {
    %c0_i32 = arith.constant 0 : i32
    %c0_i32_0 = arith.constant 0 : i32
    %c0_i32_1 = arith.constant 0 : i32
    return %c0_i32, %c0_i32_0, %arg0 : i32, i32, i32
  }
  func.func @transform_2(%arg0: i32) -> (i32, i32) {
    %c0_i32 = arith.constant 0 : i32
    %c0_i32_0 = arith.constant 0 : i32
    return %c0_i32, %arg0 : i32, i32
  }
}

</mosaic_0001>

<llo_original>
// kernel: tpu_custom_call.1
$region0: #{tpu_custom_call.1}
  #allocation0 [shape = 'u32[]', space=smem, size = 0x4, offset = 0x4, fixed_abs, tag = 'smem constant byte address 0x4 - core index']
  #allocation1 [shape = 'u32[72,128]{1,0:T(1,128)}', space=vmem, size = 0x9000, scoped, tag = 'internal scratch']
  %s0 = inlined_call_operand.vmem [shape: bf16[8,8], index: 0, kind: input, shape index: {}]
  %s1 = inlined_call_operand.vmem [shape: bf16[8,1,8], index: 1, kind: input, shape index: {}]
  %s2 = inlined_call_operand.hbm [shape: f32[1,8], index: 2, kind: output, shape index: {}]
  %s3 = sld [smem:[#allocation0]]
  $region18: #{tpu_custom_call.1} parent=0
    _
  %s5 = ssub.s32 1, %s3
  %s6 = scalar_select 0, %s5, %s3
  $region1: #{tpu_custom_call.1} parent=0
    #allocation2 [shape = 'u8[512]{0}', space=vmem, size = 0x400, scoped, tag = 'output window, operand 0, single buffered']
    #allocation3 [shape = 's32[1]{0}', space=sflag, size = 0x4, scoped, tag = 'scoped memory for tpu_custom_call.1']
    %7 = vsyncpa [#allocation3], 0
    // Predicated region
    $region2: #{tpu_custom_call.1} parent=1 // pred_check
      _
    $region3: #{tpu_custom_call.1} parent=1 // pred_check_branch
      %9 = sbr.rel (0) target = $region5
    $region4: #{tpu_custom_call.1} parent=1 // pred_region
      _
    $region5: #{tpu_custom_call.1} parent=1 // pred_fallthru
      _
    // Predicated region
    $region6: #{tpu_custom_call.1} parent=1 // pred_check
      _
    $region7: #{tpu_custom_call.1} parent=1 // pred_check_branch
      %11 = sbr.rel (0) target = $region9
    $region8: #{tpu_custom_call.1} parent=1 // pred_region
      _
    $region9: #{tpu_custom_call.1} parent=1 // pred_fallthru
      _
    %v12 = vld [vmem:[%s0] sm:$0xf]
    %v13 = vunpack.c.l.bf16 %v12
    %v14 = vld [vmem:[%s1] sm:$0x1]
    %v15 = vunpack.c.l.bf16 %v14
    %v16 = vmul.f32 %v13, %v15
    %s17 = scalar_lea.vmem %s1, 1
    %v18 = vld [vmem:[%s17] sm:$0x1]
    %v19 = vunpack.c.l.bf16 %v18
    %v21 = vperm.slane %v19, 0
    %v23 = vmul.f32 %v13, %v21
    %v25 = vrot.slane %v23, 1
    %v27 = vadd.f32 %v16, %v25
    %s28 = scalar_lea.vmem %s1, 2
    %v29 = vld [vmem:[%s28] sm:$0x1]
    %v30 = vunpack.c.l.bf16 %v29
    %v32 = vperm.slane %v30, 0
    %v34 = vmul.f32 %v13, %v32
    %v36 = vrot.slane %v34, 2
    %v38 = vadd.f32 %v27, %v36
    %s39 = scalar_lea.vmem %s1, 3
    %v40 = vld [vmem:[%s39] sm:$0x1]
    %v41 = vunpack.c.l.bf16 %v40
    %v43 = vperm.slane %v41, 0
    %v45 = vmul.f32 %v13, %v43
    %v47 = vrot.slane %v45, 3
    %v49 = vadd.f32 %v38, %v47
    %s50 = scalar_lea.vmem %s1, 4
    %v51 = vld [vmem:[%s50] sm:$0x1]
    %v52 = vunpack.c.l.bf16 %v51
    %v54 = vperm.slane %v52, 0
    %v56 = vmul.f32 %v13, %v54
    %v58 = vrot.slane %v56, 4
    %v60 = vadd.f32 %v49, %v58
    %s61 = scalar_lea.vmem %s1, 5
    %v62 = vld [vmem:[%s61] sm:$0x1]
    %v63 = vunpack.c.l.bf16 %v62
    %v65 = vperm.slane %v63, 0
    %v67 = vmul.f32 %v13, %v65
    %v69 = vrot.slane %v67, 5
    %v71 = vadd.f32 %v60, %v69
    %s72 = scalar_lea.vmem %s1, 6
    %v73 = vld [vmem:[%s72] sm:$0x1]
    %v74 = vunpack.c.l.bf16 %v73
    %v76 = vperm.slane %v74, 0
    %v78 = vmul.f32 %v13, %v76
    %v80 = vrot.slane %v78, 6
    %v82 = vadd.f32 %v71, %v80
    %s83 = scalar_lea.vmem %s1, 7
    %v84 = vld [vmem:[%s83] sm:$0x1]
    %v85 = vunpack.c.l.bf16 %v84
    %v87 = vperm.slane %v85, 0
    %v89 = vmul.f32 %v13, %v87
    %v91 = vrot.slane %v89, 7
    %v93 = vadd.f32 %v82, %v91
    %v94 = vtanh.pop %v93
    %vm95 = vcmask 57344
    %96 = vst.msk [vmem:[#allocation2] sm:$0x1] %vm95, %v94
    // Predicated region
    $region10: #{tpu_custom_call.1} parent=1 // pred_check
      _
    $region11: #{tpu_custom_call.1} parent=1 // pred_check_branch
      %98 = sbr.rel (0) target = $region13
    $region12: #{tpu_custom_call.1} parent=1 // pred_region
      %100 = vsyncadd [#allocation3], 0
      %s102 = sshll.u32 [#allocation2], 4
      %s103 = int_to_ptr.vmem [resolvable:$true] %s102
      %s104 = sshll.u32 %s2, 4
      %s105 = int_to_ptr.hbm [resolvable:$true] %s104
      %107 = dma.vmem_to_hbm [thread:$0]  %s103, 16, %s105, [#allocation3]
    $region13: #{tpu_custom_call.1} parent=1 // pred_fallthru
      _
    // Predicated region
    $region14: #{tpu_custom_call.1} parent=1 // pred_check
      _
    $region15: #{tpu_custom_call.1} parent=1 // pred_check_branch
      %109 = sbr.rel (0) target = $region17
    $region16: #{tpu_custom_call.1} parent=1 // pred_region
      %111 = dma.done [#allocation3], 16
    $region17: #{tpu_custom_call.1} parent=1 // pred_fallthru
      _
    %112 = vsyncpa [#allocation3], 1

</llo_original>
